<compile_context>
chip_gen: v7x
topology: tpu7x:2x2x1
jax: 0.10.0
libtpu: 0.0.40
codegen_flags: <defaults>
</compile_context>

<pallas_src>
import functools

import jax
import jax.numpy as jnp
from jax.experimental import pallas as pl
from jax.experimental.pallas import tpu as pltpu

_LOG2 = 0.6931471805599453


def _ssp(x):
    # shifted softplus (PhysNet activation), numerically stable, ssp(0) == 0.
    # Kept in f32 on the VPU/EUP.
    return jnp.maximum(x, 0.0) + jnp.log1p(jnp.exp(-jnp.abs(x))) - _LOG2


def _round_up(x, m):
    return (x + m - 1) // m * m


def _pad2(a, rows, cols, dtype=jnp.float32):
    a = a.astype(dtype)
    return jnp.pad(a, ((0, rows - a.shape[0]), (0, cols - a.shape[1])))


def _pad3(a, rows, cols, dtype=jnp.float32):
    a = a.astype(dtype)
    return jnp.pad(a, ((0, 0), (0, rows - a.shape[1]), (0, cols - a.shape[2])))


def _tpu_vmem_limit_bytes():
    """Generation-aware scoped VMEM limit: ~96 MiB on v5e/v6e (128 MiB phys),
    ~48 MiB on v7x (64 MiB phys)."""
    phys = 128 * 1024 * 1024
    try:
        info = pltpu.get_tpu_info()
        phys = int(getattr(info, "vmem_capacity_bytes", phys))
    except Exception:
        pass
    return int(min((phys * 3) // 4, 100 * 1024 * 1024))


def _atom_tile_rows():
    """256-row atom tiles for the 2x256^2 MXU (v6e/v7x), 128 on v5e (4x128^2)."""
    try:
        info = pltpu.get_tpu_info()
        name = str(getattr(info, "chip_version", "")).lower()
        if "5" in name:
            return 128
    except Exception:
        pass
    return 256


# --------------------------------------------------------------------------
# Phase 1: atom-row-tiled ("parallel") preparation of xi and xj'.
# --------------------------------------------------------------------------
def _pre_kernel(feat_ref, wij_ref, bij_ref, xi_ref, xj_ref, *, f_pad):
    """x = ssp(features); [xi | xj'] = ssp(x @ [Wi | Wj] + [bi | bj])."""
    f32 = jnp.float32
    x = _ssp(feat_ref[...])                                        # f32 (tn, F)
    # fused dense_i | dense_j: bf16 operands, f32 accumulation
    xij = _ssp(jnp.dot(x.astype(jnp.bfloat16), wij_ref[...],
                       preferred_element_type=f32) + bij_ref[...])
    xi_ref[...] = xij[:, :f_pad]
    xj_ref[...] = xij[:, f_pad:]


# --------------------------------------------------------------------------
# Phase 2: pair-tiled ("arbitrary") message aggregation with an index-driven
# gather/scatter (scalar-prefetched idx_i / idx_j, resident f32 accumulator).
# --------------------------------------------------------------------------
def _pair_kernel(idx_i_ref, idx_j_ref, desc_ref, wr_ref, xjfull_ref,
                 out_ref, g_ref, *, tile_p):
    f32 = jnp.float32
    t = pl.program_id(0)

    @pl.when(t == 0)
    def _():
        out_ref[...] = jnp.zeros_like(out_ref)

    # radial2atom dense layer (no bias / activation): bf16 operands, f32 acc.
    g_ref[...] = jnp.dot(desc_ref[...], wr_ref[...],
                         preferred_element_type=f32)

    base = t * tile_p

    # Index-driven gather/scatter over this tile's pairs: O(tile_p * F) work,
    # no O(P*N) one-hots and no O(P*N*F) selection matmuls.  Exact f32 path.
    def body(p, carry):
        j = idx_j_ref[base + p]
        i = idx_i_ref[base + p]
        gxj = g_ref[pl.ds(p, 1), :] * xjfull_ref[pl.ds(j, 1), :]
        out_ref[pl.ds(i, 1), :] = out_ref[pl.ds(i, 1), :] + gxj
        return carry

    jax.lax.fori_loop(0, tile_p, body, 0, unroll=False)


# --------------------------------------------------------------------------
# Phase 3: atom-row-tiled ("parallel") residual stacks + output dense layer.
# --------------------------------------------------------------------------
def _residual_stack(z, w1_ref, b1_ref, w2_ref, b2_ref, n_layers):
    """z <- z + ssp(ssp(z) @ W1 + b1) @ W2 + b2, repeated n_layers times."""
    f32, bf16 = jnp.float32, jnp.bfloat16

    def one(zz, w1, b1, w2, b2):
        h = _ssp(jnp.dot(_ssp(zz).astype(bf16), w1,
                         preferred_element_type=f32) + b1)
        return zz + jnp.dot(h.astype(bf16), w2,
                            preferred_element_type=f32) + b2

    if n_layers <= 4:
        # shallow stacks: static unroll (scheduler sees the whole chain)
        for r in range(n_layers):
            z = one(z, w1_ref[r], b1_ref[r], w2_ref[r], b2_ref[r])
        return z

    # deep stacks: bounded-body loop with dynamic leading-axis weight indexing
    # to keep vreg live ranges bounded (avoids a spill-bound regime).
    def body(r, zz):
        return one(zz, w1_ref[r], b1_ref[r], w2_ref[r], b2_ref[r])

    return jax.lax.fori_loop(0, n_layers, body, z, unroll=False)


def _post_kernel(feat_ref, xi_ref, xjsum_ref,
                 wres1_ref, bres1_ref, wres2_ref, bres2_ref,
                 wo_ref, bo_ref, scal_ref,
                 wf1_ref, bf1_ref, wf2_ref, bf2_ref,
                 out_ref, *, nres_i, nres_f):
    f32, bf16 = jnp.float32, jnp.bfloat16

    message = xi_ref[...] + xjsum_ref[...]
    message = _residual_stack(message, wres1_ref, bres1_ref,
                              wres2_ref, bres2_ref, nres_i)
    message = _ssp(message)

    # recompute the cheap skip activation instead of carrying it through HBM
    x = _ssp(feat_ref[...])
    y = (scal_ref[...] * x
         + jnp.dot(message.astype(bf16), wo_ref[...],
                   preferred_element_type=f32)
         + bo_ref[...])

    y = _residual_stack(y, wf1_ref, bf1_ref, wf2_ref, bf2_ref, nres_f)
    out_ref[...] = y


# --------------------------------------------------------------------------
# Wrapper
# --------------------------------------------------------------------------
def interaction_block(features, descriptors, idx_i, idx_j, params):
    f32, bf16 = jnp.float32, jnp.bfloat16
    n_atoms, n_feat = features.shape
    n_pairs, n_rad = descriptors.shape
    nres_i = params["w_res1"].shape[0]
    nres_f = params["w_feat1"].shape[0]

    # lane/sublane friendly padding: feature & radial dims -> multiples of 128,
    # atom / pair counts -> multiples of their tiles (multiples of 8).
    f_pad = _round_up(n_feat, 128)
    r_pad = _round_up(n_rad, 128)

    tn = min(_atom_tile_rows(), _round_up(n_atoms, 8))     # atom tile rows
    n_pad = _round_up(n_atoms, tn)
    tp = min(512, _round_up(n_pairs, 8))                   # pair tile rows
    p_pad = _round_up(n_pairs, tp)

    vmem_limit = _tpu_vmem_limit_bytes()

    feat_p = _pad2(features, n_pad, f_pad, f32)
    desc_p = _pad2(descriptors, p_pad, r_pad, bf16)         # zero rows for pads
    idx_i_p = jnp.pad(idx_i.astype(jnp.int32), (0, p_pad - n_pairs))
    idx_j_p = jnp.pad(idx_j.astype(jnp.int32), (0, p_pad - n_pairs))

    # bf16 weights for the MXU (f32 accumulation); f32 biases / scaling.
    w_r = _pad2(params["w_r"], r_pad, f_pad, bf16)
    w_ij = jnp.concatenate([_pad2(params["w_i"], f_pad, f_pad, bf16),
                            _pad2(params["w_j"], f_pad, f_pad, bf16)], axis=1)
    b_ij = jnp.concatenate([_pad2(params["b_i"], 1, f_pad, f32),
                            _pad2(params["b_j"], 1, f_pad, f32)], axis=1)
    w_res1 = _pad3(params["w_res1"], f_pad, f_pad, bf16)
    b_res1 = _pad3(params["b_res1"], 1, f_pad, f32)
    w_res2 = _pad3(params["w_res2"], f_pad, f_pad, bf16)
    b_res2 = _pad3(params["b_res2"], 1, f_pad, f32)
    w_out = _pad2(params["w_out"], f_pad, f_pad, bf16)
    b_out = _pad2(params["b_out"], 1, f_pad, f32)
    scaling = _pad2(params["scaling"], 1, f_pad, f32)
    w_feat1 = _pad3(params["w_feat1"], f_pad, f_pad, bf16)
    b_feat1 = _pad3(params["b_feat1"], 1, f_pad, f32)
    w_feat2 = _pad3(params["w_feat2"], f_pad, f_pad, bf16)
    b_feat2 = _pad3(params["b_feat2"], 1, f_pad, f32)

    n_tiles_atom = n_pad // tn
    n_tiles_pair = p_pad // tp

    # ---------------- Phase 1: xi / xj' (atom-row tiled, parallel) ----------
    pre_cost = pl.CostEstimate(
        flops=2 * n_pad * f_pad * 2 * f_pad,
        transcendentals=2 * n_pad * 3 * f_pad,
        bytes_accessed=4 * n_pad * f_pad * 3 + 2 * f_pad * 2 * f_pad)
    xi, xj_full = pl.pallas_call(
        functools.partial(_pre_kernel, f_pad=f_pad),
        grid=(n_tiles_atom,),
        in_specs=[
            pl.BlockSpec((tn, f_pad), lambda i: (i, 0)),
            pl.BlockSpec((f_pad, 2 * f_pad), lambda i: (0, 0)),
            pl.BlockSpec((1, 2 * f_pad), lambda i: (0, 0)),
        ],
        out_specs=(pl.BlockSpec((tn, f_pad), lambda i: (i, 0)),
                   pl.BlockSpec((tn, f_pad), lambda i: (i, 0))),
        out_shape=(jax.ShapeDtypeStruct((n_pad, f_pad), f32),
                   jax.ShapeDtypeStruct((n_pad, f_pad), f32)),
        compiler_params=pltpu.CompilerParams(
            dimension_semantics=("parallel",),
            vmem_limit_bytes=vmem_limit),
        cost_estimate=pre_cost,
    )(feat_p, w_ij, b_ij)

    # ---------------- Phase 2: message aggregation (pair tiled, arbitrary) --
    # best-effort deeper buffering on the streamed descriptor tiles
    try:
        desc_spec = pl.BlockSpec((tp, r_pad), lambda t, ii, jj: (t, 0),
                                 pipeline_mode=pl.Buffered(3))
    except Exception:
        desc_spec = pl.BlockSpec((tp, r_pad), lambda t, ii, jj: (t, 0))

    pair_cost = pl.CostEstimate(
        flops=2 * p_pad * r_pad * f_pad + 4 * p_pad * f_pad,
        transcendentals=0,
        bytes_accessed=2 * p_pad * r_pad + 2 * r_pad * f_pad
                       + 4 * (2 * n_pad * f_pad + 2 * p_pad * f_pad))
    xj_sum = pl.pallas_call(
        functools.partial(_pair_kernel, tile_p=tp),
        grid_spec=pltpu.PrefetchScalarGridSpec(
            num_scalar_prefetch=2,                # idx_i, idx_j -> SMEM
            grid=(n_tiles_pair,),
            in_specs=[
                desc_spec,
                pl.BlockSpec((r_pad, f_pad), lambda t, ii, jj: (0, 0)),
                pl.BlockSpec((n_pad, f_pad), lambda t, ii, jj: (0, 0)),
            ],
            out_specs=pl.BlockSpec((n_pad, f_pad), lambda t, ii, jj: (0, 0)),
            scratch_shapes=[pltpu.VMEM((tp, f_pad), f32)],
        ),
        out_shape=jax.ShapeDtypeStruct((n_pad, f_pad), f32),
        compiler_params=pltpu.CompilerParams(
            dimension_semantics=("arbitrary",),
            vmem_limit_bytes=vmem_limit),
        cost_estimate=pair_cost,
    )(idx_i_p, idx_j_p, desc_p, w_r, xj_full)

    # ---------------- Phase 3: residual stacks + output (atom tiled) --------
    n_mm = 2 * nres_i + 1 + 2 * nres_f
    post_cost = pl.CostEstimate(
        flops=2 * n_pad * f_pad * f_pad * n_mm,
        transcendentals=2 * n_pad * f_pad * (2 * nres_i + 2 * nres_f + 2),
        bytes_accessed=4 * n_pad * f_pad * 4 + 2 * n_mm * f_pad * f_pad)
    out_p = pl.pallas_call(
        functools.partial(_post_kernel, nres_i=nres_i, nres_f=nres_f),
        grid=(n_tiles_atom,),
        in_specs=[
            pl.BlockSpec((tn, f_pad), lambda i: (i, 0)),            # features
            pl.BlockSpec((tn, f_pad), lambda i: (i, 0)),            # xi
            pl.BlockSpec((tn, f_pad), lambda i: (i, 0)),            # xj_sum
            pl.BlockSpec((nres_i, f_pad, f_pad), lambda i: (0, 0, 0)),
            pl.BlockSpec((nres_i, 1, f_pad), lambda i: (0, 0, 0)),
            pl.BlockSpec((nres_i, f_pad, f_pad), lambda i: (0, 0, 0)),
            pl.BlockSpec((nres_i, 1, f_pad), lambda i: (0, 0, 0)),
            pl.BlockSpec((f_pad, f_pad), lambda i: (0, 0)),
            pl.BlockSpec((1, f_pad), lambda i: (0, 0)),
            pl.BlockSpec((1, f_pad), lambda i: (0, 0)),
            pl.BlockSpec((nres_f, f_pad, f_pad), lambda i: (0, 0, 0)),
            pl.BlockSpec((nres_f, 1, f_pad), lambda i: (0, 0, 0)),
            pl.BlockSpec((nres_f, f_pad, f_pad), lambda i: (0, 0, 0)),
            pl.BlockSpec((nres_f, 1, f_pad), lambda i: (0, 0, 0)),
        ],
        out_specs=pl.BlockSpec((tn, f_pad), lambda i: (i, 0)),
        out_shape=jax.ShapeDtypeStruct((n_pad, f_pad), f32),
        compiler_params=pltpu.CompilerParams(
            dimension_semantics=("parallel",),
            vmem_limit_bytes=vmem_limit),
        cost_estimate=post_cost,
    )(feat_p, xi, xj_sum,
      w_res1, b_res1, w_res2, b_res2,
      w_out, b_out, scaling,
      w_feat1, b_feat1, w_feat2, b_feat2)

    return out_p[:n_atoms, :n_feat]


# --------------------------------------------------------------------------
# Pure-JAX reference (module semantics) and parameter construction
# --------------------------------------------------------------------------
def reference(features, descriptors, idx_i, idx_j, p, matmul_dtype=None):
    """Pure-JAX reference.  matmul_dtype=jnp.bfloat16 mimics the kernel's
    bf16-operand / f32-accumulate dense matmuls (gather/scatter stays f32)."""
    def mm(a, b):
        if matmul_dtype is not None:
            a = a.astype(matmul_dtype)
            b = b.astype(matmul_dtype)
        return jnp.dot(a, b, preferred_element_type=jnp.float32)

    x = _ssp(features)
    g = mm(descriptors, p["w_r"])
    xi = _ssp(mm(x, p["w_i"]) + p["b_i"])
    xjf = _ssp(mm(x, p["w_j"]) + p["b_j"])
    gxj = g * xjf[idx_j]
    xj = jnp.zeros_like(xi).at[idx_i].add(gxj)
    message = xi + xj
    for r in range(p["w_res1"].shape[0]):
        h = _ssp(mm(_ssp(message), p["w_res1"][r]) + p["b_res1"][r])
        message = message + mm(h, p["w_res2"][r]) + p["b_res2"][r]
    message = _ssp(message)
    y = p["scaling"] * x + mm(message, p["w_out"]) + p["b_out"]
    for r in range(p["w_feat1"].shape[0]):
        h = _ssp(mm(_ssp(y), p["w_feat1"][r]) + p["b_feat1"][r])
        y = y + mm(h, p["w_feat2"][r]) + p["b_feat2"][r]
    return y


def make_params(key, n_atombasis, n_radialbasis, n_res_interaction,
                n_res_features):
    ks = jax.random.split(key, 16)
    f32 = jnp.float32

    def xavier(k, n_in, n_out):
        std = (2.0 / (n_in + n_out)) ** 0.5
        return (std * jax.random.normal(k, (n_in, n_out))).astype(f32)

    def stack_w(k, n):
        return jnp.stack([xavier(kk, n_atombasis, n_atombasis)
                          for kk in jax.random.split(k, n)])

    def bias(k, shape):
        return (0.1 * jax.random.normal(k, shape)).astype(f32)

    F, R = n_atombasis, n_radialbasis
    return {
        # all weights stored pre-transposed as (in_features, out_features)
        "w_r": xavier(ks[0], R, F),                       # radial2atom, no bias
        "w_i": xavier(ks[1], F, F), "b_i": bias(ks[2], (1, F)),
        "w_j": xavier(ks[3], F, F), "b_j": bias(ks[4], (1, F)),
        "w_res1": stack_w(ks[5], n_res_interaction),
        "b_res1": bias(ks[6], (n_res_interaction, 1, F)),
        "w_res2": stack_w(ks[7], n_res_interaction),
        "b_res2": bias(ks[8], (n_res_interaction, 1, F)),
        "w_out": xavier(ks[9], F, F), "b_out": bias(ks[10], (1, F)),
        "scaling": (1.0 + 0.1 * jax.random.normal(ks[15], (1, F))).astype(f32),
        "w_feat1": stack_w(ks[11], n_res_features),
        "b_feat1": bias(ks[12], (n_res_features, 1, F)),
        "w_feat2": stack_w(ks[13], n_res_features),
        "b_feat2": bias(ks[14], (n_res_features, 1, F)),
    }


if __name__ == "__main__":
    key = jax.random.PRNGKey(0)
    k_feat, k_desc, k_i, k_j, k_par = jax.random.split(key, 5)

    n_atoms = 16
    n_atombasis = 64
    n_radialbasis = 32
    n_pairs = 48
    n_residual_interaction = 2
    n_residual_features = 2

    features = jax.random.normal(k_feat, (n_atoms, n_atombasis), jnp.float32)
    descriptors = jax.random.normal(k_desc, (n_pairs, n_radialbasis),
                                    jnp.float32)
    idx_i = jax.random.randint(k_i, (n_pairs,), 0, n_atoms, jnp.int32)
    idx_j = jax.random.randint(k_j, (n_pairs,), 0, n_atoms, jnp.int32)

    params = make_params(k_par, n_atombasis, n_radialbasis,
                         n_residual_interaction, n_residual_features)

    out = interaction_block(features, descriptors, idx_i, idx_j, params)
    out = jax.block_until_ready(out)
    assert out.shape == (n_atoms, n_atombasis)

    # Structural check: kernel vs a reference using the same bf16-operand /
    # f32-accumulate matmuls (tight tolerance).
    ref_bf16 = reference(features, descriptors, idx_i, idx_j, params,
                         matmul_dtype=jnp.bfloat16)
    assert jnp.allclose(out, ref_bf16, atol=1e-2, rtol=1e-2), \
        "mismatch vs bf16-matched reference"

    # Numerical sanity check vs full-f32 module semantics (loose tolerance
    # accounts for the deliberate bf16 matmul operands).
    ref_f32 = reference(features, descriptors, idx_i, idx_j, params)
    assert jnp.allclose(out, ref_f32, atol=2e-1, rtol=2e-1), \
        "mismatch vs f32 reference"

    print("KERNEL_OK")
</pallas_src>

<mosaic_0001>
module attributes {stable_mosaic.version = 11 : i64} {
  func.func @_pre_kernel(%arg0: i32, %arg1: memref<16x128xf32, #tpu.memory_space<vmem>>, %arg2: memref<128x256xbf16, #tpu.memory_space<vmem>>, %arg3: memref<1x256xf32, #tpu.memory_space<vmem>>, %arg4: memref<16x128xf32, #tpu.memory_space<vmem>>, %arg5: memref<16x128xf32, #tpu.memory_space<vmem>>) attributes {dimension_semantics = [#tpu.dimension_semantics<parallel>], iteration_bounds = array<i64: 1>, scalar_prefetch = 0 : i64, scratch_operands = 0 : i64, tpu.core_type = #tpu.core_type<tc>, window_params = [{transform_indices = @transform_0, window_bounds = array<i64: 16, 128>}, {pipeline_mode = #tpu.pipeline_mode<synchronous>, transform_indices = @transform_1, window_bounds = array<i64: 128, 256>}, {pipeline_mode = #tpu.pipeline_mode<synchronous>, transform_indices = @transform_2, window_bounds = array<i64: 1, 256>}, {transform_indices = @transform_3, window_bounds = array<i64: 16, 128>}, {transform_indices = @transform_4, window_bounds = array<i64: 16, 128>}]} {
    %c0 = arith.constant 0 : index
    %c0_0 = arith.constant 0 : index
    %0 = vector.load %arg1[%c0, %c0_0] : memref<16x128xf32, #tpu.memory_space<vmem>>, vector<16x128xf32>
    %cst = arith.constant 0.000000e+00 : f32
    %1 = vector.broadcast %cst : f32 to vector<16x128xf32>
    %2 = arith.maximumf %0, %1 : vector<16x128xf32>
    %3 = math.absf %0 : vector<16x128xf32>
    %cst_1 = arith.constant 0.000000e+00 : f32
    %4 = vector.broadcast %cst_1 : f32 to vector<16x128xf32>
    %5 = arith.subf %4, %3 : vector<16x128xf32>
    %6 = math.exp %5 : vector<16x128xf32>
    %7 = math.log1p %6 : vector<16x128xf32>
    %8 = arith.addf %2, %7 : vector<16x128xf32>
    %cst_2 = arith.constant 0.693147182 : f32
    %9 = vector.broadcast %cst_2 : f32 to vector<16x128xf32>
    %10 = arith.subf %8, %9 : vector<16x128xf32>
    %11 = arith.truncf %10 : vector<16x128xf32> to vector<16x128xbf16>
    %c0_3 = arith.constant 0 : index
    %c0_4 = arith.constant 0 : index
    %12 = vector.load %arg2[%c0_3, %c0_4] : memref<128x256xbf16, #tpu.memory_space<vmem>>, vector<128x256xbf16>
    %cst_5 = arith.constant dense<0.000000e+00> : vector<16x256xf32>
    %13 = tpu.matmul %11, %12, %cst_5 {dimension_numbers = #tpu.dot_dimension_numbers<[1], [0], [0], [1], [0, 0, 1, 1], [], []>} : vector<16x128xbf16>, vector<128x256xbf16>, vector<16x256xf32> -> vector<16x256xf32>
    %c0_6 = arith.constant 0 : index
    %c0_7 = arith.constant 0 : index
    %14 = vector.load %arg3[%c0_6, %c0_7] : memref<1x256xf32, #tpu.memory_space<vmem>>, vector<1x256xf32>
    %15 = vector.broadcast %14 : vector<1x256xf32> to vector<16x256xf32>
    %16 = arith.addf %13, %15 : vector<16x256xf32>
    %cst_8 = arith.constant 0.000000e+00 : f32
    %17 = vector.broadcast %cst_8 : f32 to vector<16x256xf32>
    %18 = arith.maximumf %16, %17 : vector<16x256xf32>
    %19 = math.absf %16 : vector<16x256xf32>
    %cst_9 = arith.constant 0.000000e+00 : f32
    %20 = vector.broadcast %cst_9 : f32 to vector<16x256xf32>
    %21 = arith.subf %20, %19 : vector<16x256xf32>
    %22 = math.exp %21 : vector<16x256xf32>
    %23 = math.log1p %22 : vector<16x256xf32>
    %24 = arith.addf %18, %23 : vector<16x256xf32>
    %cst_10 = arith.constant 0.693147182 : f32
    %25 = vector.broadcast %cst_10 : f32 to vector<16x256xf32>
    %26 = arith.subf %24, %25 : vector<16x256xf32>
    %27 = vector.extract_strided_slice %26 {offsets = [0, 0], sizes = [16, 128], strides = [1, 1]} : vector<16x256xf32> to vector<16x128xf32>
    %c0_11 = arith.constant 0 : index
    %c0_12 = arith.constant 0 : index
    %28 = vector.load %arg4[%c0_11, %c0_12] : memref<16x128xf32, #tpu.memory_space<vmem>>, vector<16x128xf32>
    tpu.vector_store %arg4[%c0_11, %c0_12], %27 {strides = array<i32>} : memref<16x128xf32, #tpu.memory_space<vmem>>, vector<16x128xf32>,
    %29 = vector.extract_strided_slice %26 {offsets = [0, 128], sizes = [16, 128], strides = [1, 1]} : vector<16x256xf32> to vector<16x128xf32>
    %c0_13 = arith.constant 0 : index
    %c0_14 = arith.constant 0 : index
    %30 = vector.load %arg5[%c0_13, %c0_14] : memref<16x128xf32, #tpu.memory_space<vmem>>, vector<16x128xf32>
    tpu.vector_store %arg5[%c0_13, %c0_14], %29 {strides = array<i32>} : memref<16x128xf32, #tpu.memory_space<vmem>>, vector<16x128xf32>,
    return
  }
  func.func @transform_0(%arg0: i32) -> (i32, i32) {
    %c0_i32 = arith.constant 0 : i32
    %c0_i32_0 = arith.constant 0 : i32
    return %arg0, %c0_i32 : i32, i32
  }
  func.func @transform_1(%arg0: i32) -> (i32, i32) {
    %c0_i32 = arith.constant 0 : i32
    %c0_i32_0 = arith.constant 0 : i32
    %c0_i32_1 = arith.constant 0 : i32
    return %c0_i32, %c0_i32_0 : i32, i32
  }
  func.func @transform_2(%arg0: i32) -> (i32, i32) {
    %c0_i32 = arith.constant 0 : i32
    %c0_i32_0 = arith.constant 0 : i32
    %c0_i32_1 = arith.constant 0 : i32
    return %c0_i32, %c0_i32_0 : i32, i32
  }
  func.func @transform_3(%arg0: i32) -> (i32, i32) {
    %c0_i32 = arith.constant 0 : i32
    %c0_i32_0 = arith.constant 0 : i32
    return %arg0, %c0_i32 : i32, i32
  }
  func.func @transform_4(%arg0: i32) -> (i32, i32) {
    %c0_i32 = arith.constant 0 : i32
    %c0_i32_0 = arith.constant 0 : i32
    return %arg0, %c0_i32 : i32, i32
  }
}

</mosaic_0001>

<llo_original>
// kernel: tpu_custom_call.1
$region0: #{tpu_custom_call.1}
  #allocation0 [shape = 'u32[]', space=smem, size = 0x4, offset = 0x4, fixed_abs, tag = 'smem constant byte address 0x4 - core index']
  #allocation1 [shape = 'u32[144,128]{1,0:T(1,128)}', space=vmem, size = 0x12000, scoped, tag = 'internal scratch']
  %s0 = inlined_call_operand.hbm [shape: f32[16,128], index: 0, kind: input, shape index: {}]
  %s1 = inlined_call_operand.hbm [shape: bf16[128,256], index: 1, kind: input, shape index: {}]
  %s2 = inlined_call_operand.hbm [shape: f32[1,256], index: 2, kind: input, shape index: {}]
  %s3 = inlined_call_operand.hbm [shape: f32[16,128], index: 3, kind: output, shape index: {0}]
  %s4 = inlined_call_operand.hbm [shape: f32[16,128], index: 4, kind: output, shape index: {1}]
  %5 = xla_tuple %s3, %s4
  %s6 = sld [smem:[#allocation0]]
  $region42: #{tpu_custom_call.1} parent=0
    _
  %s8 = ssub.s32 1, %s6
  %s9 = scalar_select 0, %s8, %s6
  $region1: #{tpu_custom_call.1} parent=0
    #allocation2 [shape = 'u8[8192]{0}', space=vmem, size = 0x2000, scoped, tag = 'input window, operand 0, single buffered']
    #allocation3 [shape = 's32[1]{0}', space=sflag, size = 0x4, scoped, tag = 'scoped memory for tpu_custom_call.1']
    #allocation4 [shape = 's32[1]{0}', space=sflag, size = 0x4, scoped, tag = 'scoped memory for tpu_custom_call.1']
    #allocation5 [shape = 'u8[65536]{0}', space=vmem, size = 0x10000, scoped, tag = 'input window, operand 1, single buffered']
    #allocation6 [shape = 's32[1]{0}', space=sflag, size = 0x4, scoped, tag = 'scoped memory for tpu_custom_call.1']
    #allocation7 [shape = 'u8[1024]{0}', space=vmem, size = 0x400, scoped, tag = 'input window, operand 2, single buffered']
    #allocation8 [shape = 'u8[8192]{0}', space=vmem, size = 0x2000, scoped, tag = 'output window, operand 0, single buffered']
    #allocation9 [shape = 'u8[8192]{0}', space=vmem, size = 0x2000, scoped, tag = 'output window, operand 1, single buffered']
    #allocation10 [shape = 's32[1]{0}', space=sflag, size = 0x4, scoped, tag = 'scoped memory for tpu_custom_call.1']
    %10 = vsyncpa [#allocation3], 0
    %11 = vsyncpa [#allocation6], 0
    %12 = vsyncpa [#allocation4], 0
    %13 = vsyncpa [#allocation10], 0
    // Predicated region
    $region2: #{tpu_custom_call.1} parent=1 // pred_check
      _
    $region3: #{tpu_custom_call.1} parent=1 // pred_check_branch
      %15 = sbr.rel (0) target = $region5
    $region4: #{tpu_custom_call.1} parent=1 // pred_region
      %s17 = ssub.s32 256, 256
      %18 = vsyncadd [#allocation3], %s17
      %s19 = sshll.u32 [#allocation2], 4
      %s20 = int_to_ptr.vmem [resolvable:$true] %s19
      %25 = dma.hbm_to_vmem [thread:$0]  %s0, 256, %s20, [#allocation3], 128, 128, 8
    $region5: #{tpu_custom_call.1} parent=1 // pred_fallthru
      _
    // Predicated region
    $region6: #{tpu_custom_call.1} parent=1 // pred_check
      _
    $region7: #{tpu_custom_call.1} parent=1 // pred_check_branch
      %27 = sbr.rel (0) target = $region9
    $region8: #{tpu_custom_call.1} parent=1 // pred_region
      %s29 = ssub.s32 2048, 2048
      %30 = vsyncadd [#allocation6], %s29
      %s31 = sshll.u32 [#allocation5], 4
      %s32 = int_to_ptr.vmem [resolvable:$true] %s31
      %37 = dma.hbm_to_vmem [thread:$0]  %s1, 2048, %s32, [#allocation6], 128, 128, 8
    $region9: #{tpu_custom_call.1} parent=1 // pred_fallthru
      _
    // Predicated region
    $region10: #{tpu_custom_call.1} parent=1 // pred_check
      _
    $region11: #{tpu_custom_call.1} parent=1 // pred_check_branch
      %39 = sbr.rel (0) target = $region13
    $region12: #{tpu_custom_call.1} parent=1 // pred_region
      %s41 = ssub.s32 32, 32
      %42 = vsyncadd [#allocation6], %s41
      %s44 = sshll.u32 [#allocation7], 4
      %s45 = int_to_ptr.vmem [resolvable:$true] %s44
      %47 = dma.hbm_to_vmem [thread:$0]  %s2, 32, %s45, [#allocation6]
    $region13: #{tpu_custom_call.1} parent=1 // pred_fallthru
      _
    // Predicated region
    $region14: #{tpu_custom_call.1} parent=1 // pred_check
      _
    $region15: #{tpu_custom_call.1} parent=1 // pred_check_branch
      %49 = sbr.rel (0) target = $region17
    $region16: #{tpu_custom_call.1} parent=1 // pred_region
      %50 = dma.done [#allocation3], 256
    $region17: #{tpu_custom_call.1} parent=1 // pred_fallthru
      _
    // Predicated region
    $region18: #{tpu_custom_call.1} parent=1 // pred_check
      _
    $region19: #{tpu_custom_call.1} parent=1 // pred_check_branch
      %52 = sbr.rel (0) target = $region21
    $region20: #{tpu_custom_call.1} parent=1 // pred_region
      %53 = dma.done [#allocation6], 2048
    $region21: #{tpu_custom_call.1} parent=1 // pred_fallthru
      _
    // Predicated region
    $region22: #{tpu_custom_call.1} parent=1 // pred_check
      _
    $region23: #{tpu_custom_call.1} parent=1 // pred_check_branch
      %55 = sbr.rel (0) target = $region25
    $region24: #{tpu_custom_call.1} parent=1 // pred_region
      %56 = dma.done [#allocation6], 32
    $region25: #{tpu_custom_call.1} parent=1 // pred_fallthru
      _
    %v58 = vld [vmem:[#allocation2] sm:$0xff]
    %v59 = vld [vmem:[#allocation2 + $0x8] sm:$0xff]
    %v60 = vmax.f32 %v58, 0.0
    %v61 = vmax.f32 %v59, 0.0
    %v62 = vand.u32 2147483647, %v58
    %v63 = vand.u32 2147483647, %v59
    %v64 = vsub.f32 0.0, %v62
    %v65 = vsub.f32 0.0, %v63
    %v66 = vmul.f32 %v64, 1.442695
    %v67 = vpow.pop %v66
    %v68 = vmul.f32 %v65, 1.442695
    %v69 = vpow.pop %v68
    %v70 = vadd.f32 %v67, 1.0
    %v71 = vlog2.pop %v70
    %v72 = vmul.f32 %v71, 0.6931472
    %v73 = vmul.f32 -0.5, %v67
    %v74 = vadd.f32 %v73, 1.0
    %v75 = vmul.f32 %v74, %v67
    %v76 = vand.u32 2147483647, %v67
    %vm77 = vcmp.lt.f32.partialorder %v76, 0.0004427343
    %v78 = vsel %vm77, %v75, %v72
    %v79 = vadd.f32 %v69, 1.0
    %v80 = vlog2.pop %v79
    %v81 = vmul.f32 %v80, 0.6931472
    %v82 = vmul.f32 -0.5, %v69
    %v83 = vadd.f32 %v82, 1.0
    %v84 = vmul.f32 %v83, %v69
    %v85 = vand.u32 2147483647, %v69
    %vm86 = vcmp.lt.f32.partialorder %v85, 0.0004427343
    %v87 = vsel %vm86, %v84, %v81
    %v88 = vadd.f32 %v60, %v78
    %v89 = vadd.f32 %v61, %v87
    %v90 = vsub.f32 %v88, 0.6931472
    %v91 = vsub.f32 %v89, 0.6931472
    %v92 = vpack.c.bf16 %v91, %v90
    %v93 = vld [vmem:[#allocation5] sm:$0xff]
    %v94 = vld [vmem:[#allocation5 + $0x8] sm:$0xff]
    %v95 = vld [vmem:[#allocation5 + $0x10] sm:$0xff]
    %v96 = vld [vmem:[#allocation5 + $0x18] sm:$0xff]
    %v97 = vld [vmem:[#allocation5 + $0x20] sm:$0xff]
    %v98 = vld [vmem:[#allocation5 + $0x28] sm:$0xff]
    %v99 = vld [vmem:[#allocation5 + $0x30] sm:$0xff]
    %v100 = vld [vmem:[#allocation5 + $0x38] sm:$0xff]
    %v101 = vld [vmem:[#allocation5 + $0x40] sm:$0xff]
    %v102 = vld [vmem:[#allocation5 + $0x48] sm:$0xff]
    %v103 = vld [vmem:[#allocation5 + $0x50] sm:$0xff]
    %v104 = vld [vmem:[#allocation5 + $0x58] sm:$0xff]
    %v105 = vld [vmem:[#allocation5 + $0x60] sm:$0xff]
    %v106 = vld [vmem:[#allocation5 + $0x68] sm:$0xff]
    %v107 = vld [vmem:[#allocation5 + $0x70] sm:$0xff]
    %v108 = vld [vmem:[#allocation5 + $0x78] sm:$0xff]
    %v109 = vld [vmem:[#allocation7] sm:$0x3]
    %v111 = vlaneseq
    %v112 = vshrl.u32 %v111, 7
    %v113 = vsub.s32 0, %v112
    %v114 = vrot.slane %v109, %v113
    %v115 = vlaneseq
    %v116 = vshrl.u32 %v115, 7
    %v117 = vsub.s32 1, %v116
    %v118 = vrot.slane %v109, %v117
    %v137 = vunpack.c.l.b16 %v93
    %v138 = vunpack.c.h.b16 %v93
    %v139 = vunpack.c.l.b16 %v94
    %v140 = vunpack.c.h.b16 %v94
    %v141 = vunpack.c.l.b16 %v95
    %v142 = vunpack.c.h.b16 %v95
    %v143 = vunpack.c.l.b16 %v96
    %v144 = vunpack.c.h.b16 %v96
    %v145 = vunpack.c.l.b16 %v97
    %v146 = vunpack.c.h.b16 %v97
    %v147 = vunpack.c.l.b16 %v98
    %v148 = vunpack.c.h.b16 %v98
    %v149 = vunpack.c.l.b16 %v99
    %v150 = vunpack.c.h.b16 %v99
    %v151 = vunpack.c.l.b16 %v100
    %v152 = vunpack.c.h.b16 %v100
    %v153 = vunpack.c.l.b16 %v101
    %v154 = vunpack.c.h.b16 %v101
    %v155 = vunpack.c.l.b16 %v102
    %v156 = vunpack.c.h.b16 %v102
    %v157 = vunpack.c.l.b16 %v103
    %v158 = vunpack.c.h.b16 %v103
    %v159 = vunpack.c.l.b16 %v104
    %v160 = vunpack.c.h.b16 %v104
    %v161 = vunpack.c.l.b16 %v105
    %v162 = vunpack.c.h.b16 %v105
    %v163 = vunpack.c.l.b16 %v106
    %v164 = vunpack.c.h.b16 %v106
    %v165 = vunpack.c.l.b16 %v107
    %v166 = vunpack.c.h.b16 %v107
    %v167 = vunpack.c.l.b16 %v108
    %v168 = vunpack.c.h.b16 %v108
    %v169 = vpack.c.b16 %v139, %v137
    %v170 = vpack.c.b16 %v140, %v138
    %v171 = vpack.c.b16 %v143, %v141
    %v172 = vpack.c.b16 %v144, %v142
    %v173 = vpack.c.b16 %v147, %v145
    %v174 = vpack.c.b16 %v148, %v146
    %v175 = vpack.c.b16 %v151, %v149
    %v176 = vpack.c.b16 %v152, %v150
    %v177 = vpack.c.b16 %v155, %v153
    %v178 = vpack.c.b16 %v156, %v154
    %v179 = vpack.c.b16 %v159, %v157
    %v180 = vpack.c.b16 %v160, %v158
    %v181 = vpack.c.b16 %v163, %v161
    %v182 = vpack.c.b16 %v164, %v162
    %v183 = vpack.c.b16 %v167, %v165
    %v184 = vpack.c.b16 %v168, %v166
    %201 = vmatprep.subr.bf16.mxu0 %v170
    %202 = vmatpush1.bf16.msra.mxu0 %v169
    %203 = vmatprep.subr.bf16.mxu0 %v172
    %204 = vmatpush1.bf16.msra.mxu0 %v171
    %205 = vmatprep.subr.bf16.mxu0 %v174
    %206 = vmatpush1.bf16.msra.mxu0 %v173
    %207 = vmatprep.subr.bf16.mxu0 %v176
    %208 = vmatpush1.bf16.msra.mxu0 %v175
    %209 = vmatprep.subr.bf16.mxu0 %v178
    %210 = vmatpush1.bf16.msra.mxu0 %v177
    %211 = vmatprep.subr.bf16.mxu0 %v180
    %212 = vmatpush1.bf16.msra.mxu0 %v179
    %213 = vmatprep.subr.bf16.mxu0 %v182
    %214 = vmatpush1.bf16.msra.mxu0 %v181
    %215 = vmatprep.subr.bf16.mxu0 %v184
    %216 = vmatpush1.bf16.msra.mxu0 %v183
    %217 = vmatprep.subr.bf16.mxu0 0
    %218 = vmatpush1.bf16.msra.mxu0 0
    %219 = vmatprep.subr.bf16.mxu0 0
    %220 = vmatpush1.bf16.msra.mxu0 0
    %221 = vmatprep.subr.bf16.mxu0 0
    %222 = vmatpush1.bf16.msra.mxu0 0
    %223 = vmatprep.subr.bf16.mxu0 0
    %224 = vmatpush1.bf16.msra.mxu0 0
    %225 = vmatprep.subr.bf16.mxu0 0
    %226 = vmatpush1.bf16.msra.mxu0 0
    %227 = vmatprep.subr.bf16.mxu0 0
    %228 = vmatpush1.bf16.msra.mxu0 0
    %229 = vmatprep.subr.bf16.mxu0 0
    %230 = vmatpush1.bf16.msra.mxu0 0
    %231 = vmatprep.subr.bf16.mxu0 0
    %232 = vmatpush1.bf16.msra.mxu0 0
    %233 = vmatprep.mubr.bf16.mxu0 0
    %234 = vmatmul.mubr.bf16.gmra.mrb[0].mxu0 %v92
    %v235 = vpop.f32.mrb[0].mxu0
    %v236 = vadd.f32 %v114, %v235
    %v237 = vpop.f32.mrb[0].mxu0
    %v238 = vadd.f32 %v118, %v237
    %v239 = vpop.f32.mrb[0].mxu0
    %v240 = vadd.f32 %v114, %v239
    %v241 = vpop.f32.mrb[0].mxu0
    %v242 = vadd.f32 %v118, %v241
    %243 = vdwg.mxu0
    %v244 = vmax.f32 %v236, 0.0
    %v245 = vmax.f32 %v238, 0.0
    %v246 = vmax.f32 %v240, 0.0
    %v247 = vmax.f32 %v242, 0.0
    %v248 = vand.u32 2147483647, %v236
    %v249 = vand.u32 2147483647, %v238
    %v250 = vand.u32 2147483647, %v240
    %v251 = vand.u32 2147483647, %v242
    %v252 = vsub.f32 0.0, %v248
    %v253 = vsub.f32 0.0, %v249
    %v254 = vsub.f32 0.0, %v250
    %v255 = vsub.f32 0.0, %v251
    %v256 = vmul.f32 %v252, 1.442695
    %v257 = vpow.pop %v256
    %v258 = vmul.f32 %v253, 1.442695
    %v259 = vpow.pop %v258
    %v260 = vmul.f32 %v254, 1.442695
    %v261 = vpow.pop %v260
    %v262 = vmul.f32 %v255, 1.442695
    %v263 = vpow.pop %v262
    %v264 = vadd.f32 %v257, 1.0
    %v265 = vlog2.pop %v264
    %v266 = vmul.f32 %v265, 0.6931472
    %v267 = vmul.f32 -0.5, %v257
    %v268 = vadd.f32 %v267, 1.0
    %v269 = vmul.f32 %v268, %v257
    %v270 = vand.u32 2147483647, %v257
    %vm271 = vcmp.lt.f32.partialorder %v270, 0.0004427343
    %v272 = vsel %vm271, %v269, %v266
    %v273 = vadd.f32 %v259, 1.0
    %v274 = vlog2.pop %v273
    %v275 = vmul.f32 %v274, 0.6931472
    %v276 = vmul.f32 -0.5, %v259
    %v277 = vadd.f32 %v276, 1.0
    %v278 = vmul.f32 %v277, %v259
    %v279 = vand.u32 2147483647, %v259
    %vm280 = vcmp.lt.f32.partialorder %v279, 0.0004427343
    %v281 = vsel %vm280, %v278, %v275
    %v282 = vadd.f32 %v261, 1.0
    %v283 = vlog2.pop %v282
    %v284 = vmul.f32 %v283, 0.6931472
    %v285 = vmul.f32 -0.5, %v261
    %v286 = vadd.f32 %v285, 1.0
    %v287 = vmul.f32 %v286, %v261
    %v288 = vand.u32 2147483647, %v261
    %vm289 = vcmp.lt.f32.partialorder %v288, 0.0004427343
    %v290 = vsel %vm289, %v287, %v284
    %v291 = vadd.f32 %v263, 1.0
    %v292 = vlog2.pop %v291
    %v293 = vmul.f32 %v292, 0.6931472
    %v294 = vmul.f32 -0.5, %v263
    %v295 = vadd.f32 %v294, 1.0
    %v296 = vmul.f32 %v295, %v263
    %v297 = vand.u32 2147483647, %v263
    %vm298 = vcmp.lt.f32.partialorder %v297, 0.0004427343
    %v299 = vsel %vm298, %v296, %v293
    %v300 = vadd.f32 %v244, %v272
    %v301 = vadd.f32 %v245, %v281
    %v302 = vadd.f32 %v246, %v290
    %v303 = vadd.f32 %v247, %v299
    %v304 = vsub.f32 %v300, 0.6931472
    %v305 = vsub.f32 %v301, 0.6931472
    %v306 = vsub.f32 %v302, 0.6931472
    %v307 = vsub.f32 %v303, 0.6931472
    %308 = vst [vmem:[#allocation8] sm:$0xff] %v304
    %309 = vst [vmem:[#allocation8 + $0x8] sm:$0xff] %v306
    %310 = vst [vmem:[#allocation9] sm:$0xff] %v305
    %311 = vst [vmem:[#allocation9 + $0x8] sm:$0xff] %v307
    // Predicated region
    $region26: #{tpu_custom_call.1} parent=1 // pred_check
      _
    $region27: #{tpu_custom_call.1} parent=1 // pred_check_branch
      %313 = sbr.rel (0) target = $region29
    $region28: #{tpu_custom_call.1} parent=1 // pred_region
      %s315 = ssub.s32 256, 256
      %316 = vsyncadd [#allocation4], %s315
      %s317 = sshll.u32 [#allocation8], 4
      %s318 = int_to_ptr.vmem [resolvable:$true] %s317
      %323 = dma.vmem_to_hbm [thread:$0]  %s318, 256, %s3, [#allocation4], 128, 128, 8
    $region29: #{tpu_custom_call.1} parent=1 // pred_fallthru
      _
    // Predicated region
    $region30: #{tpu_custom_call.1} parent=1 // pred_check
      _
    $region31: #{tpu_custom_call.1} parent=1 // pred_check_branch
      %325 = sbr.rel (0) target = $region33
    $region32: #{tpu_custom_call.1} parent=1 // pred_region
      %s327 = ssub.s32 256, 256
      %328 = vsyncadd [#allocation10], %s327
      %s329 = sshll.u32 [#allocation9], 4
      %s330 = int_to_ptr.vmem [resolvable:$true] %s329
      %335 = dma.vmem_to_hbm [thread:$0]  %s330, 256, %s4, [#allocation10], 128, 128, 8
    $region33: #{tpu_custom_call.1} parent=1 // pred_fallthru
      _
    // Predicated region
    $region34: #{tpu_custom_call.1} parent=1 // pred_check
      _
    $region35: #{tpu_custom_call.1} parent=1 // pred_check_branch
      %337 = sbr.rel (0) target = $region37
    $region36: #{tpu_custom_call.1} parent=1 // pred_region
      %338 = dma.done [#allocation4], 256
    $region37: #{tpu_custom_call.1} parent=1 // pred_fallthru
      _
    // Predicated region
    $region38: #{tpu_custom_call.1} parent=1 // pred_check
      _
    $region39: #{tpu_custom_call.1} parent=1 // pred_check_branch
      %340 = sbr.rel (0) target = $region41
    $region40: #{tpu_custom_call.1} parent=1 // pred_region
      %341 = dma.done [#allocation10], 256
    $region41: #{tpu_custom_call.1} parent=1 // pred_fallthru
      _
    %342 = vsyncpa [#allocation3], 1
    %343 = vsyncpa [#allocation6], 1
    %344 = vsyncpa [#allocation4], 1
    %345 = vsyncpa [#allocation10], 1

</llo_original>
